<compile_context>
chip_gen: v6e
topology: v6e:2x2x1
jax: 0.10.0
libtpu: 0.0.40
codegen_flags: <defaults>
</compile_context>

<pallas_src>
import functools
import numpy as np
import jax
import jax.numpy as jnp
from jax.experimental import pallas as pl
from jax.experimental.pallas import tpu as pltpu


# --------------------------------- helpers ----------------------------------

def _round_up(x, m):
    return (x + m - 1) // m * m


@functools.lru_cache(maxsize=None)
def _num_cores():
    """2 for megacore chips (v4 / v5p / v7x), else 1 (v5e / v6e)."""
    try:
        kind = jax.devices()[0].device_kind.lower()
    except Exception:
        return 1
    return 2 if any(t in kind for t in ("v7", "v4", "v5p")) else 1


def _pick_tile(size, pref, mult):
    """Tile <= pref, multiple of `mult`, dividing round_up(size, mult)."""
    padded = _round_up(size, mult)
    t = min(pref, padded)
    t = max(mult, (t // mult) * mult)
    while padded % t:
        t -= mult
    return t, padded


def _vmem_limit(block_bytes):
    """Scoped-VMEM cap sized from the per-step block footprint (+ margin)."""
    return int(min(48 << 20, max(16 << 20, 4 * block_bytes + (8 << 20))))


# ----------------------- fused matmul (1x1 / im2col) -------------------------

def _mm_bn_act_kernel(*refs, apply_relu, has_residual):
    """One-shot matmul; epilogue = per-column scale/bias (+residual) (+ReLU)."""
    if has_residual:
        a_ref, b_ref, s_ref, c_ref, r_ref, o_ref = refs
    else:
        a_ref, b_ref, s_ref, c_ref, o_ref = refs
        r_ref = None
    y = jnp.dot(a_ref[...], b_ref[...], preferred_element_type=jnp.float32)
    y = y * s_ref[...] + c_ref[...]
    if r_ref is not None:
        y = y + r_ref[...].astype(jnp.float32)
    if apply_relu:
        y = jnp.maximum(y, 0.0)
    o_ref[...] = y.astype(o_ref.dtype)


def _matmul_bn_act(a, b, scale, bias, residual, *, apply_relu,
                   out_dtype=jnp.bfloat16):
    """out = maybe_relu((a @ b) * scale + bias [+ residual]).

    a: (M, K) bf16.  b: (K, Np) bf16 pre-padded at build time (Np % 128 == 0).
    scale/bias: (1, Np) f32.  residual: (M, Np) bf16 or None.
    K is taken as a single full-extent block (no K padding / K grid).
    """
    M, K = a.shape
    Kb, Np = b.shape
    assert K == Kb and Np % 128 == 0

    m_mult = 16 if M % 16 == 0 else 8
    tm_pref = 256                       # MXU-row aligned on v6e/v7x
    tn_pref = 512 if M <= 64 else 256   # small-M layers: fewer, fatter steps
    tm, Mp = _pick_tile(M, tm_pref, m_mult)
    tn, _ = _pick_tile(Np, tn_pref, 128)

    # Megacore (2 TensorCores): keep at least two "parallel" blocks.
    if _num_cores() >= 2 and (Mp // tm) * (Np // tn) < 2:
        if M >= 256:
            tm = max(m_mult, _round_up(Mp // 2, m_mult))
            while Mp % tm:
                tm -= m_mult
        elif tn > 128:
            tn = max(128, (tn // 2) // 128 * 128)
            while Np % tn:
                tn -= 128

    a_p = a if Mp == M else jnp.pad(a, ((0, Mp - M), (0, 0)))
    in_arrays = [a_p, b, scale, bias]
    in_specs = [
        pl.BlockSpec((tm, K), lambda i, j: (i, 0)),
        pl.BlockSpec((K, tn), lambda i, j: (0, j)),
        pl.BlockSpec((1, tn), lambda i, j: (0, j)),
        pl.BlockSpec((1, tn), lambda i, j: (0, j)),
    ]
    has_residual = residual is not None
    if has_residual:
        r_p = residual if Mp == M else jnp.pad(residual, ((0, Mp - M), (0, 0)))
        in_arrays.append(r_p)
        in_specs.append(pl.BlockSpec((tm, tn), lambda i, j: (i, j)))

    blk_bytes = (tm * K + K * tn + 2 * tn + tm * tn) * 2 + tm * tn * 4
    if has_residual:
        blk_bytes += tm * tn * 2
    bytes_accessed = Mp * K * 2 + K * Np * 2 + \
        Mp * Np * jnp.dtype(out_dtype).itemsize + \
        (Mp * Np * 2 if has_residual else 0)

    out = pl.pallas_call(
        functools.partial(_mm_bn_act_kernel, apply_relu=apply_relu,
                          has_residual=has_residual),
        out_shape=jax.ShapeDtypeStruct((Mp, Np), out_dtype),
        grid_spec=pltpu.PrefetchScalarGridSpec(
            num_scalar_prefetch=0,
            grid=(Mp // tm, Np // tn),
            in_specs=in_specs,
            out_specs=pl.BlockSpec((tm, tn), lambda i, j: (i, j)),
        ),
        compiler_params=pltpu.CompilerParams(
            dimension_semantics=("parallel", "parallel"),
            vmem_limit_bytes=_vmem_limit(blk_bytes)),
        cost_estimate=pl.CostEstimate(
            flops=2 * Mp * Np * K, transcendentals=0,
            bytes_accessed=int(bytes_accessed)),
    )(*in_arrays)
    return out if Mp == M else out[:M]


# --------------------- implicit-im2col 3x3 stride-1 conv ----------------------

def _conv3x3_kernel(x_ref, b_ref, s_ref, c_ref, o_ref, acc_ref, *, cs, offsets):
    """Nine contiguous row-shifted matmuls accumulated in VMEM, fused BN+ReLU."""
    acc_ref[...] = jnp.zeros_like(acc_ref)
    mq = o_ref.shape[0]
    for idx, off in enumerate(offsets):                  # static unroll (9)
        xs = x_ref[off:off + mq, :]                      # contiguous row slice
        wk = b_ref[idx * cs:(idx + 1) * cs, :]
        acc_ref[...] += jnp.dot(xs, wk, preferred_element_type=jnp.float32)
    y = acc_ref[...] * s_ref[...] + c_ref[...]
    o_ref[...] = jnp.maximum(y, 0.0).astype(o_ref.dtype)


def _conv3x3_s1_bn_relu(x, b9, scale, bias):
    """3x3 / stride-1 / pad-1 conv + folded BN + ReLU, NHWC bf16.

    The spatially zero-padded input is flattened to (N*Hp*Wp, Cs); output row
    q picks up contribution Xf[q + i*Wp + j] @ W[i,j], so the nine kernel taps
    are *contiguous* row-shifted views of one matrix.  Rows straddling image /
    pad boundaries are garbage and are sliced off afterwards; the 9x patch
    matrix never exists in HBM.
    """
    N, H, W, Cs = x.shape
    K9, Np = b9.shape
    assert K9 == 9 * Cs and Np % 128 == 0
    Hp, Wp = H + 2, W + 2
    nrows = N * Hp * Wp

    mall = nrows - 2 * Wp - 2            # last valid output row + 1
    mq = _round_up(mall, 8)
    mx = _round_up(max(nrows, mq + 2 * Wp + 2), 8)

    xf = jnp.pad(x, ((0, 0), (1, 1), (1, 1), (0, 0))).reshape(nrows, Cs)
    if mx > nrows:
        xf = jnp.pad(xf, ((0, mx - nrows), (0, 0)))

    offsets = tuple(i * Wp + j for i in range(3) for j in range(3))

    tn = min(256, Np)
    if _num_cores() >= 2 and Np // tn < 2 and tn > 128:
        tn = 128                          # engage the second TensorCore

    blk_bytes = (mx * Cs + 9 * Cs * tn + 2 * tn + mq * tn) * 2 + mq * tn * 4
    y = pl.pallas_call(
        functools.partial(_conv3x3_kernel, cs=Cs, offsets=offsets),
        out_shape=jax.ShapeDtypeStruct((mq, Np), jnp.bfloat16),
        grid_spec=pltpu.PrefetchScalarGridSpec(
            num_scalar_prefetch=0,
            grid=(Np // tn,),
            in_specs=[
                pl.BlockSpec((mx, Cs), lambda j: (0, 0)),      # full input, once
                pl.BlockSpec((9 * Cs, tn), lambda j: (0, j)),
                pl.BlockSpec((1, tn), lambda j: (0, j)),
                pl.BlockSpec((1, tn), lambda j: (0, j)),
            ],
            out_specs=pl.BlockSpec((mq, tn), lambda j: (0, j)),
            scratch_shapes=[pltpu.VMEM((mq, tn), jnp.float32)],
        ),
        compiler_params=pltpu.CompilerParams(
            dimension_semantics=("parallel",),
            vmem_limit_bytes=_vmem_limit(blk_bytes)),
        cost_estimate=pl.CostEstimate(
            flops=2 * mq * 9 * Cs * Np, transcendentals=0,
            bytes_accessed=int(mx * Cs * 2 + 9 * Cs * Np * 2 + mq * Np * 2)),
    )(xf, b9, scale, bias)

    y = jnp.pad(y, ((0, nrows - mq), (0, 0)))
    return y.reshape(N, Hp, Wp, Np)[:, :H, :W, :]


# ------------------------------ Conv lowering --------------------------------

def _im2col(x, k, stride, pad):
    """NHWC -> (N*Ho*Wo, k*k*C) patches, (kh, kw, C) flattening order."""
    N, H, W, C = x.shape
    xp = jnp.pad(x, ((0, 0), (pad, pad), (pad, pad), (0, 0)))
    Ho = (H + 2 * pad - k) // stride + 1
    Wo = (W + 2 * pad - k) // stride + 1
    cols = []
    for i in range(k):
        for j in range(k):
            cols.append(xp[:, i:i + stride * (Ho - 1) + 1:stride,
                           j:j + stride * (Wo - 1) + 1:stride, :])
    patches = jnp.stack(cols, axis=3)            # (N, Ho, Wo, k*k, C)
    return patches.reshape(N * Ho * Wo, k * k * C), (N, Ho, Wo)


@functools.partial(jax.jit, static_argnames=("k", "stride", "pad", "relu"))
def conv_bn(x, b, scale, bias, residual=None, *, k, stride, pad, relu):
    """Conv2d + folded BN + optional fused (residual add +) ReLU.  NHWC bf16.

    `b` is the build-time (k*k*cin_store, cout_store) bf16 weight matrix;
    `scale`/`bias` are the (1, cout_store) f32 folded-BN epilogue vectors.
    """
    cout = b.shape[1]
    if k == 3 and stride == 1 and residual is None and relu:
        return _conv3x3_s1_bn_relu(x, b, scale, bias)
    if k == 1:
        xs = x if stride == 1 else x[:, ::stride, ::stride, :]
        n, ho, wo, cin = xs.shape
        a = xs.reshape(n * ho * wo, cin)
    else:
        # TODO(synk): the 3 stride-2 3x3 convs and the 7x7 stem still use a
        # materialized im2col; a strided implicit variant would remove it.
        a, (n, ho, wo) = _im2col(x, k, stride, pad)
    r = None if residual is None else residual.reshape(n * ho * wo, cout)
    y = _matmul_bn_act(a, b, scale, bias, r, apply_relu=relu)
    return y.reshape(n, ho, wo, cout)


@jax.jit
def maxpool_3x3_s2p1(x):
    """MaxPool2d(kernel=3, stride=2, padding=1), NHWC (9-way maximum tree)."""
    N, H, W, C = x.shape
    Ho = (H + 2 - 3) // 2 + 1
    Wo = (W + 2 - 3) // 2 + 1
    xp = jnp.pad(x, ((0, 0), (1, 1), (1, 1), (0, 0)),
                 constant_values=-jnp.inf)
    out = None
    for i in range(3):
        for j in range(3):
            s = xp[:, i:i + 2 * (Ho - 1) + 1:2, j:j + 2 * (Wo - 1) + 1:2, :]
            out = s if out is None else jnp.maximum(out, s)
    return out


# -------------------------------- Parameters ---------------------------------

def _conv_bn_params(key, cin, cout, k, cin_store=None):
    """Conv weight + folded eval-mode BN, pre-laid-out for the kernels.

    All padding (Cin rows to the stored activation width, Cout cols to a
    multiple of 128) and the (kh,kw,cin,cout) -> (K, Np) reshape + bf16 cast
    are done once here, so the forward pass never pads or reshuffles weights.
    """
    cin_store = cin if cin_store is None else cin_store
    cout_store = _round_up(cout, 128)
    w = jax.random.normal(key, (cout, cin, k, k), jnp.float32) * \
        np.sqrt(2.0 / (cin * k * k))
    # BatchNorm folded (eval mode): gamma=1, beta=0, mean=0, var=1.
    scale = jnp.ones((cout,), jnp.float32) / jnp.sqrt(1.0 + 1e-5)
    bias = jnp.zeros((cout,), jnp.float32)
    wt = jnp.transpose(w, (2, 3, 1, 0))                       # (kh,kw,cin,cout)
    wt = jnp.pad(wt, ((0, 0), (0, 0), (0, cin_store - cin),
                      (0, cout_store - cout)))
    return dict(
        b=wt.reshape(k * k * cin_store, cout_store).astype(jnp.bfloat16),
        scale=jnp.pad(scale, (0, cout_store - cout)).reshape(1, cout_store),
        bias=jnp.pad(bias, (0, cout_store - cout)).reshape(1, cout_store),
        k=k)


def build_resnet101_params(seed=0):
    key = jax.random.PRNGKey(seed)

    def nk():
        nonlocal key
        key, sub = jax.random.split(key)
        return sub

    expansion = 4
    params = {"conv1": _conv_bn_params(nk(), 3, 64, 7)}        # stem, cin_store=3
    in_store = 128                       # stem output is carried 128-wide
    stage_cfg = [(64, 3, 1), (128, 4, 2), (256, 23, 2), (512, 3, 2)]
    inplanes = 64
    stages = []
    for planes, nblocks, stride in stage_cfg:
        blocks = []
        for bidx in range(nblocks):
            s = stride if bidx == 0 else 1
            mid_store = _round_up(planes, 128)
            blk = dict(
                conv1=_conv_bn_params(nk(), inplanes, planes, 1,
                                      cin_store=in_store),
                conv2=_conv_bn_params(nk(), planes, planes, 3,
                                      cin_store=mid_store),
                conv3=_conv_bn_params(nk(), planes, planes * expansion, 1,
                                      cin_store=mid_store),
                stride=s,
            )
            if bidx == 0 and (s != 1 or inplanes != planes * expansion):
                blk["downsample"] = _conv_bn_params(
                    nk(), inplanes, planes * expansion, 1, cin_store=in_store)
            blocks.append(blk)
            inplanes = planes * expansion
            in_store = _round_up(inplanes, 128)
        stages.append(blocks)
    params["stages"] = stages
    # Replacement head: nn.Linear(2048, 2, bias=False)
    params["fc_w"] = jax.random.normal(nk(), (2, 2048), jnp.float32) * \
        np.sqrt(1.0 / 2048)
    return params


# --------------------------------- Forward -----------------------------------

def bottleneck(x, blk):
    stride = blk["stride"]
    p1, p2, p3 = blk["conv1"], blk["conv2"], blk["conv3"]
    out = conv_bn(x, p1["b"], p1["scale"], p1["bias"],
                  k=1, stride=1, pad=0, relu=True)
    out = conv_bn(out, p2["b"], p2["scale"], p2["bias"],
                  k=3, stride=stride, pad=1, relu=True)
    if "downsample" in blk:
        pd = blk["downsample"]
        # TODO(synk): the stride-1 downsample (stage-1 block 0) could share one
        # matmul with conv1 (same A); kept separate for per-column ReLU clarity.
        identity = conv_bn(x, pd["b"], pd["scale"], pd["bias"],
                           k=1, stride=stride, pad=0, relu=False)
    else:
        identity = x
    # conv3 with the residual add + ReLU fused into the matmul epilogue.
    out = conv_bn(out, p3["b"], p3["scale"], p3["bias"], identity,
                  k=1, stride=1, pad=0, relu=True)
    return out


def resnet101_forward(params, x_nchw):
    x = jnp.transpose(x_nchw, (0, 2, 3, 1)).astype(jnp.bfloat16)  # NCHW->NHWC
    p = params["conv1"]
    x = conv_bn(x, p["b"], p["scale"], p["bias"],
                k=7, stride=2, pad=3, relu=True)      # channels carried 128-wide
    x = maxpool_3x3_s2p1(x)
    for blocks in params["stages"]:
        for blk in blocks:
            x = bottleneck(x, blk)
    x = jnp.mean(x.astype(jnp.float32), axis=(1, 2))  # adaptive avg-pool to 1x1
    # fc head (2048 -> 2, no bias) is tiny: plain JAX (avoids 2->128 lane pad).
    return x @ params["fc_w"].T


if __name__ == "__main__":
    params = build_resnet101_params(seed=0)
    x = jax.random.normal(jax.random.PRNGKey(0), (2, 3, 64, 64), jnp.float32)
    out = resnet101_forward(params, x)
    out = jax.block_until_ready(out)
    assert out.shape == (2, 2), out.shape
    assert bool(jnp.all(jnp.isfinite(out)))
    print("KERNEL_OK")
</pallas_src>

<mosaic_0001>
module attributes {stable_mosaic.version = 11 : i64} {
  func.func @_mm_bn_act_kernel(%arg0: i32, %arg1: i32, %arg2: memref<256x147xbf16, #tpu.memory_space<vmem>>, %arg3: memref<147x128xbf16, #tpu.memory_space<vmem>>, %arg4: memref<1x128xf32, #tpu.memory_space<vmem>>, %arg5: memref<1x128xf32, #tpu.memory_space<vmem>>, %arg6: memref<256x128xbf16, #tpu.memory_space<vmem>>) attributes {dimension_semantics = [#tpu.dimension_semantics<parallel>, #tpu.dimension_semantics<parallel>], iteration_bounds = array<i64: 8, 1>, scalar_prefetch = 0 : i64, scratch_operands = 0 : i64, tpu.core_type = #tpu.core_type<tc>, window_params = [{transform_indices = @transform_0, window_bounds = array<i64: 256, 147>}, {transform_indices = @transform_1, window_bounds = array<i64: 147, 128>}, {transform_indices = @transform_2, window_bounds = array<i64: 1, 128>}, {transform_indices = @transform_3, window_bounds = array<i64: 1, 128>}, {transform_indices = @transform_4, window_bounds = array<i64: 256, 128>}]} {
    %c0 = arith.constant 0 : index
    %c0_0 = arith.constant 0 : index
    %0 = vector.load %arg2[%c0, %c0_0] : memref<256x147xbf16, #tpu.memory_space<vmem>>, vector<256x147xbf16>
    %c0_1 = arith.constant 0 : index
    %c0_2 = arith.constant 0 : index
    %1 = vector.load %arg3[%c0_1, %c0_2] : memref<147x128xbf16, #tpu.memory_space<vmem>>, vector<147x128xbf16>
    %cst = arith.constant dense<0.000000e+00> : vector<256x128xf32>
    %2 = tpu.matmul %0, %1, %cst {dimension_numbers = #tpu.dot_dimension_numbers<[1], [0], [0], [1], [0, 0, 1, 1], [], []>} : vector<256x147xbf16>, vector<147x128xbf16>, vector<256x128xf32> -> vector<256x128xf32>
    %c0_3 = arith.constant 0 : index
    %c0_4 = arith.constant 0 : index
    %3 = vector.load %arg4[%c0_3, %c0_4] : memref<1x128xf32, #tpu.memory_space<vmem>>, vector<1x128xf32>
    %4 = vector.broadcast %3 : vector<1x128xf32> to vector<256x128xf32>
    %5 = arith.mulf %2, %4 : vector<256x128xf32>
    %c0_5 = arith.constant 0 : index
    %c0_6 = arith.constant 0 : index
    %6 = vector.load %arg5[%c0_5, %c0_6] : memref<1x128xf32, #tpu.memory_space<vmem>>, vector<1x128xf32>
    %7 = vector.broadcast %6 : vector<1x128xf32> to vector<256x128xf32>
    %8 = arith.addf %5, %7 : vector<256x128xf32>
    %cst_7 = arith.constant 0.000000e+00 : f32
    %9 = vector.broadcast %cst_7 : f32 to vector<256x128xf32>
    %10 = arith.maximumf %8, %9 : vector<256x128xf32>
    %11 = arith.truncf %10 : vector<256x128xf32> to vector<256x128xbf16>
    %c0_8 = arith.constant 0 : index
    %c0_9 = arith.constant 0 : index
    %12 = vector.load %arg6[%c0_8, %c0_9] : memref<256x128xbf16, #tpu.memory_space<vmem>>, vector<256x128xbf16>
    tpu.vector_store %arg6[%c0_8, %c0_9], %11 {strides = array<i32>} : memref<256x128xbf16, #tpu.memory_space<vmem>>, vector<256x128xbf16>,
    return
  }
  func.func @transform_0(%arg0: i32, %arg1: i32) -> (i32, i32) {
    %c0_i32 = arith.constant 0 : i32
    %c0_i32_0 = arith.constant 0 : i32
    return %arg0, %c0_i32 : i32, i32
  }
  func.func @transform_1(%arg0: i32, %arg1: i32) -> (i32, i32) {
    %c0_i32 = arith.constant 0 : i32
    %c0_i32_0 = arith.constant 0 : i32
    return %c0_i32, %arg1 : i32, i32
  }
  func.func @transform_2(%arg0: i32, %arg1: i32) -> (i32, i32) {
    %c0_i32 = arith.constant 0 : i32
    %c0_i32_0 = arith.constant 0 : i32
    return %c0_i32, %arg1 : i32, i32
  }
  func.func @transform_3(%arg0: i32, %arg1: i32) -> (i32, i32) {
    %c0_i32 = arith.constant 0 : i32
    %c0_i32_0 = arith.constant 0 : i32
    return %c0_i32, %arg1 : i32, i32
  }
  func.func @transform_4(%arg0: i32, %arg1: i32) -> (i32, i32) {
    %c0_i32 = arith.constant 0 : i32
    return %arg0, %arg1 : i32, i32
  }
}

</mosaic_0001>

<llo_original>
// kernel: conv_bn.1
$region0: #{conv_bn.1}
  #allocation0 [shape = 'u32[]', space=smem, size = 0x4, offset = 0x4, fixed_abs, tag = 'smem constant byte address 0x4 - core index']
  #allocation1 [shape = 'u32[144,128]{1,0:T(1,128)}', space=vmem, size = 0x12000, scoped, tag = 'internal scratch']
  %s0 = inlined_call_operand.vmem [shape: bf16[2048,147], index: 0, kind: input, shape index: {}]
  %s1 = inlined_call_operand.vmem [shape: bf16[147,128], index: 1, kind: input, shape index: {}]
  %s2 = inlined_call_operand.vmem [shape: f32[1,128], index: 2, kind: input, shape index: {}]
  %s3 = inlined_call_operand.vmem [shape: f32[1,128], index: 3, kind: input, shape index: {}]
  %s4 = inlined_call_operand.hbm [shape: bf16[2048,128], index: 4, kind: output, shape index: {}]
  %s5 = sld [smem:[#allocation0]]
  $region49: #{conv_bn.1} parent=0
    _
  %s7 = ssub.s32 1, %s5
  %s8 = scalar_select 0, %s7, %s5
  $region1: #{conv_bn.1} parent=0
    #allocation2 [shape = 'u8[131072]{0}', space=vmem, size = 0x20000, scoped, tag = 'output window, operand 0']
    #allocation3 [shape = 's32[2]{0}', space=sflag, size = 0x8, scoped, tag = 'scoped memory for conv_bn.1']
    %9 = vsyncpa [#allocation3], 0
    %s10 = scalar_lea.sflag [#allocation3], 1
    %11 = vsyncpa %s10, 0
    loop: start=0, step=1, limit=10
    $region2: #{conv_bn.1} parent=1 // loop_pre_header
      _
    $region3: #{conv_bn.1} parent=1 // loop_header
      %s13 = sphi 0, %s17
      %p14 = scmp.ge.s32.totalorder %s13, 10
      %s20 = sphi 0, %s32
      %s21 = sphi 0, %s28
      %s22 = sphi 0, %s20
      %s23 = sphi 0, %s21
      %s24 = sphi 0, %s22
      %s25 = sphi 0, %s23
      %s35 = sphi 0, %s37
      %s38 = sphi 0, %s35
      %s39 = sphi 0, %s38
      %s55 = sphi 0, %s39
      %s61 = sphi 0, %s63
      %s64 = sphi 0, %s61
      %s65 = sphi 0, %s64
      %s81 = sphi 0, %s65
      %s87 = sphi 0, %s89
      %s90 = sphi 0, %s87
      %s91 = sphi 0, %s90
      %s107 = sphi 0, %s91
      %s113 = sphi 0, %s115
      %s116 = sphi 0, %s113
      %s117 = sphi 0, %s116
      %s133 = sphi 0, %s117
      %s141 = sphi 0, %s143
      %s144 = sphi 0, %s141
      %s145 = sphi 0, %s144
      %s161 = sphi 0, %s145
    $region4: #{conv_bn.1} parent=1 // loop_header_branch
      %16 = sbr.rel (%p14) target = $region8
    $region5: #{conv_bn.1} parent=1 // loop_body
      %s18 = ssub.s32 %s13, 1
      %s19 = ssub.s32 %s13, 2
      %s26 = sadd.s32 1, %s21
      %p27 = scmp.ge.s32.totalorder %s26, 1
      %s28 = scalar_select %p27, 0, %s26
      %s29 = sadd.s32 1, %s20
      %s30 = scalar_select %p27, %s29, %s20
      %p31 = scmp.ge.s32.totalorder %s30, 8
      %s32 = scalar_select %p31, 0, %s30
      %s33 = ssub.s32 %s20, %s32
      %p34 = scmp.eq.s32.totalorder %s33, 0
      %s36 = sadd.s32 %s35, 1
      %s37 = scalar_select %p34, %s35, %s36
      %p40 = pneg %p34
      %p41 = scmp.eq.s32.totalorder %s13, 7
      %p42 = por %p40, %p41
      %p43 = scmp.ne.s32.totalorder %s35, %s38
      %p44 = scmp.eq.s32.totalorder %s13, 0
      %p45 = por %p43, %p44
      %p46 = scmp.ne.s32.totalorder %s35, %s38
      %p47 = scmp.eq.s32.totalorder %s18, 7
      %p48 = por %p46, %p47
      %p49 = scmp.ne.s32.totalorder %s38, %s39
      %p50 = scmp.eq.s32.totalorder %s18, 0
      %p51 = por %p49, %p50
      %p52 = scmp.ne.s32.totalorder %s38, %s39
      %p53 = scmp.eq.s32.totalorder %s19, 7
      %p54 = por %p52, %p53
      %p56 = scmp.ne.s32.totalorder %s39, %s55
      %p57 = scmp.eq.s32.totalorder %s19, 0
      %p58 = por %p56, %p57
      %s59 = ssub.s32 %s21, %s28
      %p60 = scmp.eq.s32.totalorder %s59, 0
      %s62 = sadd.s32 %s61, 1
      %s63 = scalar_select %p60, %s61, %s62
      %p66 = pneg %p60
      %p67 = scmp.eq.s32.totalorder %s13, 7
      %p68 = por %p66, %p67
      %p69 = scmp.ne.s32.totalorder %s61, %s64
      %p70 = scmp.eq.s32.totalorder %s13, 0
      %p71 = por %p69, %p70
      %p72 = scmp.ne.s32.totalorder %s61, %s64
      %p73 = scmp.eq.s32.totalorder %s18, 7
      %p74 = por %p72, %p73
      %p75 = scmp.ne.s32.totalorder %s64, %s65
      %p76 = scmp.eq.s32.totalorder %s18, 0
      %p77 = por %p75, %p76
      %p78 = scmp.ne.s32.totalorder %s64, %s65
      %p79 = scmp.eq.s32.totalorder %s19, 7
      %p80 = por %p78, %p79
      %p82 = scmp.ne.s32.totalorder %s65, %s81
      %p83 = scmp.eq.s32.totalorder %s19, 0
      %p84 = por %p82, %p83
      %s85 = ssub.s32 %s21, %s28
      %p86 = scmp.eq.s32.totalorder %s85, 0
      %s88 = sadd.s32 %s87, 1
      %s89 = scalar_select %p86, %s87, %s88
      %p92 = pneg %p86
      %p93 = scmp.eq.s32.totalorder %s13, 7
      %p94 = por %p92, %p93
      %p95 = scmp.ne.s32.totalorder %s87, %s90
      %p96 = scmp.eq.s32.totalorder %s13, 0
      %p97 = por %p95, %p96
      %p98 = scmp.ne.s32.totalorder %s87, %s90
      %p99 = scmp.eq.s32.totalorder %s18, 7
      %p100 = por %p98, %p99
      %p101 = scmp.ne.s32.totalorder %s90, %s91
      %p102 = scmp.eq.s32.totalorder %s18, 0
      %p103 = por %p101, %p102
      %p104 = scmp.ne.s32.totalorder %s90, %s91
      %p105 = scmp.eq.s32.totalorder %s19, 7
      %p106 = por %p104, %p105
      %p108 = scmp.ne.s32.totalorder %s91, %s107
      %p109 = scmp.eq.s32.totalorder %s19, 0
      %p110 = por %p108, %p109
      %s111 = ssub.s32 %s21, %s28
      %p112 = scmp.eq.s32.totalorder %s111, 0
      %s114 = sadd.s32 %s113, 1
      %s115 = scalar_select %p112, %s113, %s114
      %p118 = pneg %p112
      %p119 = scmp.eq.s32.totalorder %s13, 7
      %p120 = por %p118, %p119
      %p121 = scmp.ne.s32.totalorder %s113, %s116
      %p122 = scmp.eq.s32.totalorder %s13, 0
      %p123 = por %p121, %p122
      %p124 = scmp.ne.s32.totalorder %s113, %s116
      %p125 = scmp.eq.s32.totalorder %s18, 7
      %p126 = por %p124, %p125
      %p127 = scmp.ne.s32.totalorder %s116, %s117
      %p128 = scmp.eq.s32.totalorder %s18, 0
      %p129 = por %p127, %p128
      %p130 = scmp.ne.s32.totalorder %s116, %s117
      %p131 = scmp.eq.s32.totalorder %s19, 7
      %p132 = por %p130, %p131
      %p134 = scmp.ne.s32.totalorder %s117, %s133
      %p135 = scmp.eq.s32.totalorder %s19, 0
      %p136 = por %p134, %p135
      %s137 = ssub.s32 %s20, %s32
      %s138 = ssub.s32 %s21, %s28
      %s139 = sor.u32 %s137, %s138
      %p140 = scmp.eq.s32.totalorder %s139, 0
      %s142 = sadd.s32 %s141, 1
      %s143 = scalar_select %p140, %s141, %s142
      %p146 = pneg %p140
      %p147 = scmp.eq.s32.totalorder %s13, 7
      %p148 = por %p146, %p147
      %p149 = scmp.ne.s32.totalorder %s141, %s144
      %p150 = scmp.eq.s32.totalorder %s13, 0
      %p151 = por %p149, %p150
      %p152 = scmp.ne.s32.totalorder %s141, %s144
      %p153 = scmp.eq.s32.totalorder %s18, 7
      %p154 = por %p152, %p153
      %p155 = scmp.ne.s32.totalorder %s144, %s145
      %p156 = scmp.eq.s32.totalorder %s18, 0
      %p157 = por %p155, %p156
      %p158 = scmp.ne.s32.totalorder %s144, %s145
      %p159 = scmp.eq.s32.totalorder %s19, 7
      %p160 = por %p158, %p159
      %p162 = scmp.ne.s32.totalorder %s145, %s161
      %p163 = scmp.eq.s32.totalorder %s19, 0
      %p164 = por %p162, %p163
      %p165 = scmp.le.s32.totalorder 1, %s13
      %p166 = scmp.lt.s32.totalorder %s13, 9
      %p167 = pnand %p165, %p166
      %p168 = pneg %p167
      // Predicated region
      $region9: #{conv_bn.1} parent=5 // pred_check
        _
      $region10: #{conv_bn.1} parent=5 // pred_check_branch
        %170 = sbr.rel (%p167) target = $region12
      $region11: #{conv_bn.1} parent=5 // pred_region
        %s171 = ssub.s32 %s13, 1
        // Predicated region
        $region13: #{conv_bn.1} parent=11 // pred_check
          %p172 = pneg %p77
        $region14: #{conv_bn.1} parent=11 // pred_check_branch
          %174 = sbr.rel (%p172) target = $region16
        $region15: #{conv_bn.1} parent=11 // pred_region
          %p175 = scmp.lt.s32.totalorder %s23, 0
          %s176 = scalar_select %p175, %s23, 0
          %s177 = smul.addr %s176, 4
          %s178 = scalar_lea.vmem %s1, %s177
        $region16: #{conv_bn.1} parent=11 // pred_fallthru
          _
        // Predicated region
        $region17: #{conv_bn.1} parent=11 // pred_check
          %p179 = pneg %p103
        $region18: #{conv_bn.1} parent=11 // pred_check_branch
          %181 = sbr.rel (%p179) target = $region20
        $region19: #{conv_bn.1} parent=11 // pred_region
          %p182 = scmp.lt.s32.totalorder %s23, 0
          %s183 = scalar_select %p182, %s23, 0
          %s184 = scalar_lea.vmem %s2, %s183
        $region20: #{conv_bn.1} parent=11 // pred_fallthru
          _
        // Predicated region
        $region21: #{conv_bn.1} parent=11 // pred_check
          %p185 = pneg %p129
        $region22: #{conv_bn.1} parent=11 // pred_check_branch
          %187 = sbr.rel (%p185) target = $region24
        $region23: #{conv_bn.1} parent=11 // pred_region
          %p188 = scmp.lt.s32.totalorder %s23, 0
          %s189 = scalar_select %p188, %s23, 0
          %s190 = scalar_lea.vmem %s3, %s189
        $region24: #{conv_bn.1} parent=11 // pred_fallthru
          _
      $region12: #{conv_bn.1} parent=5 // pred_fallthru
        _
      %p191 = scmp.lt.s32.totalorder %s13, 8
      // Predicated region
      $region25: #{conv_bn.1} parent=5 // pred_check
        %p192 = pneg %p191
      $region26: #{conv_bn.1} parent=5 // pred_check_branch
        %194 = sbr.rel (%p192) target = $region28
      $region27: #{conv_bn.1} parent=5 // pred_region
        // Predicated region
        $region29: #{conv_bn.1} parent=27 // pred_check
          %p195 = pneg %p45
        $region30: #{conv_bn.1} parent=27 // pred_check_branch
          %197 = sbr.rel (%p195) target = $region32
        $region31: #{conv_bn.1} parent=27 // pred_region
          %s198 = smul.u32 32, %s20
          %p199 = scmp.lt.s32.totalorder %s198, 255
          %s200 = scalar_select %p199, %s198, 255
          %s201 = smul.addr %s200, 2
          %s202 = smul.addr %s201, 4
          %s203 = scalar_lea.vmem %s0, %s202
          %s204 = smul.u32 32, %s20
        $region32: #{conv_bn.1} parent=27 // pred_fallthru
          _
      $region28: #{conv_bn.1} parent=5 // pred_fallthru
        _
      %p205 = scmp.le.s32.totalorder 1, %s13
      %p206 = scmp.lt.s32.totalorder %s13, 9
      %p207 = pnand %p205, %p206
      %p208 = pneg %p207
      // Predicated region
      $region33: #{conv_bn.1} parent=5 // pred_check
        _
      $region34: #{conv_bn.1} parent=5 // pred_check_branch
        %210 = sbr.rel (%p207) target = $region36
      $region35: #{conv_bn.1} parent=5 // pred_region
        %s211 = ssub.s32 %s13, 1
        %s212 = smul.u32 32, %s22
        %p213 = scmp.lt.s32.totalorder %s212, 255
        %s214 = scalar_select %p213, %s212, 255
        %s215 = smul.addr %s214, 2
        %s216 = smul.addr %s215, 4
        %s217 = scalar_lea.vmem %s0, %s216
        %p218 = pneg %p51
        %p219 = pneg %p48
        %p220 = scmp.lt.s32.totalorder %s23, 0
        %s221 = scalar_select %p220, %s23, 0
        %s222 = smul.addr %s221, 4
        %s223 = scalar_lea.vmem %s1, %s222
        %p224 = pneg %p77
        %p225 = pneg %p74
        %p226 = scmp.lt.s32.totalorder %s23, 0
        %s227 = scalar_select %p226, %s23, 0
        %s228 = scalar_lea.vmem %s2, %s227
        %p229 = pneg %p103
        %p230 = pneg %p100
        %p231 = scmp.lt.s32.totalorder %s23, 0
        %s232 = scalar_select %p231, %s23, 0
        %s233 = scalar_lea.vmem %s3, %s232
        %p234 = pneg %p129
        %p235 = pneg %p126
        %p236 = pneg %p157
        %p237 = pneg %p154
        %s238 = sand.u32 %s144, 1
        %s239 = scalar_lea.sflag [#allocation3], %s238
        %s240 = sand.u32 %s144, 1
        %s241 = smul.addr %s240, 128
        %s242 = scalar_lea.vmem [#allocation2], %s241
        %s243 = smul.u32 32, %s22
        %p244 = scmp.lt.s32.totalorder %s243, 255
        %s245 = scalar_select %p244, %s243, 255
        %s246 = smul.addr %s245, 2
        %s247 = smul.addr %s246, 4
        %s248 = scalar_lea.vmem %s0, %s247
        %s249 = smul.u32 32, %s22
        %p250 = scmp.lt.s32.totalorder %s23, 0
        %s251 = scalar_select %p250, %s23, 0
        %s252 = smul.addr %s251, 4
        %s253 = scalar_lea.vmem %s1, %s252
        %p254 = scmp.lt.s32.totalorder %s23, 0
        %s255 = scalar_select %p254, %s23, 0
        %s256 = scalar_lea.vmem %s2, %s255
        %p257 = scmp.lt.s32.totalorder %s23, 0
        %s258 = scalar_select %p257, %s23, 0
        %s259 = scalar_lea.vmem %s3, %s258
        %s260 = smul.u32 32, %s22
        %v262 = vld [vmem:[%s248] sm:$0xff]
        %v263 = vld [vmem:[%s248 + $0x8] sm:$0xff]
        %v264 = vld [vmem:[%s248 + $0x10] sm:$0xff]
        %v265 = vld [vmem:[%s248 + $0x18] sm:$0xff]
        %v266 = vld [vmem:[%s248 + $0x20] sm:$0xff]
        %v267 = vld [vmem:[%s248 + $0x28] sm:$0xff]
        %v268 = vld [vmem:[%s248 + $0x30] sm:$0xff]
        %v269 = vld [vmem:[%s248 + $0x38] sm:$0xff]
        %v270 = vld [vmem:[%s248 + $0x40] sm:$0xff]
        %v271 = vld [vmem:[%s248 + $0x48] sm:$0xff]
        %v272 = vld [vmem:[%s248 + $0x50] sm:$0xff]
        %v273 = vld [vmem:[%s248 + $0x58] sm:$0xff]
        %v274 = vld [vmem:[%s248 + $0x60] sm:$0xff]
        %v275 = vld [vmem:[%s248 + $0x68] sm:$0xff]
        %v276 = vld [vmem:[%s248 + $0x70] sm:$0xff]
        %v277 = vld [vmem:[%s248 + $0x78] sm:$0xff]
        %v278 = vld [vmem:[%s248 + $0x80] sm:$0xff]
        %v279 = vld [vmem:[%s248 + $0x88] sm:$0xff]
        %v280 = vld [vmem:[%s248 + $0x90] sm:$0xff]
        %v281 = vld [vmem:[%s248 + $0x98] sm:$0xff]
        %v282 = vld [vmem:[%s248 + $0xa0] sm:$0xff]
        %v283 = vld [vmem:[%s248 + $0xa8] sm:$0xff]
        %v284 = vld [vmem:[%s248 + $0xb0] sm:$0xff]
        %v285 = vld [vmem:[%s248 + $0xb8] sm:$0xff]
        %v286 = vld [vmem:[%s248 + $0xc0] sm:$0xff]
        %v287 = vld [vmem:[%s248 + $0xc8] sm:$0xff]
        %v288 = vld [vmem:[%s248 + $0xd0] sm:$0xff]
        %v289 = vld [vmem:[%s248 + $0xd8] sm:$0xff]
        %v290 = vld [vmem:[%s248 + $0xe0] sm:$0xff]
        %v291 = vld [vmem:[%s248 + $0xe8] sm:$0xff]
        %v292 = vld [vmem:[%s248 + $0xf0] sm:$0xff]
        %v293 = vld [vmem:[%s248 + $0xf8] sm:$0xff]
        %v294 = vld [vmem:[%s253] sm:$0xf]
        %v295 = vld [vmem:[%s253 + $0x4] sm:$0xf]
        %v296 = vld [vmem:[%s253 + $0x8] sm:$0xf]
        %v297 = vld [vmem:[%s253 + $0xc] sm:$0xf]
        %v298 = vld [vmem:[%s253 + $0x10] sm:$0xf]
        %v299 = vld [vmem:[%s253 + $0x14] sm:$0xf]
        %v300 = vld [vmem:[%s253 + $0x18] sm:$0xf]
        %v301 = vld [vmem:[%s253 + $0x1c] sm:$0xf]
        %v302 = vld [vmem:[%s253 + $0x20] sm:$0xf]
        %v303 = vld [vmem:[%s253 + $0x24] sm:$0xf]
        %v304 = vld [vmem:[%s253 + $0x28] sm:$0xf]
        %v305 = vld [vmem:[%s253 + $0x2c] sm:$0xf]
        %v306 = vld [vmem:[%s253 + $0x30] sm:$0xf]
        %v307 = vld [vmem:[%s253 + $0x34] sm:$0xf]
        %v308 = vld [vmem:[%s253 + $0x38] sm:$0xf]
        %v309 = vld [vmem:[%s253 + $0x3c] sm:$0xf]
        %v310 = vld [vmem:[%s253 + $0x40] sm:$0xf]
        %v311 = vld [vmem:[%s253 + $0x44] sm:$0xf]
        %v312 = vld [vmem:[%s253 + $0x48] sm:$0x3]
        %v345 = vunpack.c.l.b16 %v262
        %v346 = vunpack.c.h.b16 %v262
        %v347 = vunpack.c.l.b16 %v263
        %v348 = vunpack.c.h.b16 %v263
        %v349 = vunpack.c.l.b16 %v264
        %v350 = vunpack.c.h.b16 %v264
        %v351 = vunpack.c.l.b16 %v265
        %v352 = vunpack.c.h.b16 %v265
        %v353 = vunpack.c.l.b16 %v266
        %v354 = vunpack.c.h.b16 %v266
        %v355 = vunpack.c.l.b16 %v267
        %v356 = vunpack.c.h.b16 %v267
        %v357 = vunpack.c.l.b16 %v268
        %v358 = vunpack.c.h.b16 %v268
        %v359 = vunpack.c.l.b16 %v269
        %v360 = vunpack.c.h.b16 %v269
        %v361 = vunpack.c.l.b16 %v270
        %v362 = vunpack.c.h.b16 %v270
        %v363 = vunpack.c.l.b16 %v271
        %v364 = vunpack.c.h.b16 %v271
        %v365 = vunpack.c.l.b16 %v272
        %v366 = vunpack.c.h.b16 %v272
        %v367 = vunpack.c.l.b16 %v273
        %v368 = vunpack.c.h.b16 %v273
        %v369 = vunpack.c.l.b16 %v274
        %v370 = vunpack.c.h.b16 %v274
        %v371 = vunpack.c.l.b16 %v275
        %v372 = vunpack.c.h.b16 %v275
        %v373 = vunpack.c.l.b16 %v276
        %v374 = vunpack.c.h.b16 %v276
        %v375 = vunpack.c.l.b16 %v277
        %v376 = vunpack.c.h.b16 %v277
        %v377 = vunpack.c.l.b16 %v278
        %v378 = vunpack.c.h.b16 %v278
        %v379 = vunpack.c.l.b16 %v279
        %v380 = vunpack.c.h.b16 %v279
        %v381 = vunpack.c.l.b16 %v280
        %v382 = vunpack.c.h.b16 %v280
        %v383 = vunpack.c.l.b16 %v281
        %v384 = vunpack.c.h.b16 %v281
        %v385 = vunpack.c.l.b16 %v282
        %v386 = vunpack.c.h.b16 %v282
        %v387 = vunpack.c.l.b16 %v283
        %v388 = vunpack.c.h.b16 %v283
        %v389 = vunpack.c.l.b16 %v284
        %v390 = vunpack.c.h.b16 %v284
        %v391 = vunpack.c.l.b16 %v285
        %v392 = vunpack.c.h.b16 %v285
        %v393 = vunpack.c.l.b16 %v286
        %v394 = vunpack.c.h.b16 %v286
        %v395 = vunpack.c.l.b16 %v287
        %v396 = vunpack.c.h.b16 %v287
        %v397 = vunpack.c.l.b16 %v288
        %v398 = vunpack.c.h.b16 %v288
        %v399 = vunpack.c.l.b16 %v289
        %v400 = vunpack.c.h.b16 %v289
        %v401 = vunpack.c.l.b16 %v290
        %v402 = vunpack.c.h.b16 %v290
        %v403 = vunpack.c.l.b16 %v291
        %v404 = vunpack.c.h.b16 %v291
        %v405 = vunpack.c.l.b16 %v292
        %v406 = vunpack.c.h.b16 %v292
        %v407 = vunpack.c.l.b16 %v293
        %v408 = vunpack.c.h.b16 %v293
        %v409 = vpack.c.b16 %v347, %v345
        %v410 = vpack.c.b16 %v348, %v346
        %v411 = vpack.c.b16 %v351, %v349
        %v412 = vpack.c.b16 %v352, %v350
        %v413 = vpack.c.b16 %v355, %v353
        %v414 = vpack.c.b16 %v356, %v354
        %v415 = vpack.c.b16 %v359, %v357
        %v416 = vpack.c.b16 %v360, %v358
        %v417 = vpack.c.b16 %v363, %v361
        %v418 = vpack.c.b16 %v364, %v362
        %v419 = vpack.c.b16 %v367, %v365
        %v420 = vpack.c.b16 %v368, %v366
        %v421 = vpack.c.b16 %v371, %v369
        %v422 = vpack.c.b16 %v372, %v370
        %v423 = vpack.c.b16 %v375, %v373
        %v424 = vpack.c.b16 %v376, %v374
        %v425 = vpack.c.b16 %v379, %v377
        %v426 = vpack.c.b16 %v380, %v378
        %v427 = vpack.c.b16 %v383, %v381
        %v428 = vpack.c.b16 %v384, %v382
        %v429 = vpack.c.b16 %v387, %v385
        %v430 = vpack.c.b16 %v388, %v386
        %v431 = vpack.c.b16 %v391, %v389
        %v432 = vpack.c.b16 %v392, %v390
        %v433 = vpack.c.b16 %v395, %v393
        %v434 = vpack.c.b16 %v396, %v394
        %v435 = vpack.c.b16 %v399, %v397
        %v436 = vpack.c.b16 %v400, %v398
        %v437 = vpack.c.b16 %v403, %v401
        %v438 = vpack.c.b16 %v404, %v402
        %v439 = vpack.c.b16 %v407, %v405
        %v440 = vpack.c.b16 %v408, %v406
        %v476 = vunpack.c.l.b16 %v294
        %v477 = vunpack.c.l.b16 %v295
        %v478 = vunpack.c.l.b16 %v296
        %v479 = vunpack.c.l.b16 %v297
        %v480 = vunpack.c.l.b16 %v298
        %v481 = vunpack.c.l.b16 %v299
        %v482 = vunpack.c.l.b16 %v300
        %v483 = vunpack.c.l.b16 %v301
        %v484 = vunpack.c.l.b16 %v302
        %v485 = vunpack.c.l.b16 %v303
        %v486 = vunpack.c.l.b16 %v304
        %v487 = vunpack.c.l.b16 %v305
        %v488 = vunpack.c.l.b16 %v306
        %v489 = vunpack.c.l.b16 %v307
        %v490 = vunpack.c.l.b16 %v308
        %v491 = vunpack.c.l.b16 %v309
        %v492 = vunpack.c.l.b16 %v310
        %v493 = vunpack.c.l.b16 %v311
        %v494 = vunpack.c.l.b16 %v312
        %v495 = vpack.c.b16 %v477, %v476
        %v496 = vpack.c.b16 %v479, %v478
        %v497 = vpack.c.b16 %v481, %v480
        %v498 = vpack.c.b16 %v483, %v482
        %v499 = vpack.c.b16 %v485, %v484
        %v500 = vpack.c.b16 %v487, %v486
        %v501 = vpack.c.b16 %v489, %v488
        %v502 = vpack.c.b16 %v491, %v490
        %v503 = vpack.c.b16 %v493, %v492
        %v504 = vpack.c.b16 %v494, %v494
        %vm514 = vcmask 154624
        %v516 = vsel %vm514, %v410, 0
        %v519 = vsel %vm514, %v412, 0
        %v522 = vsel %vm514, %v414, 0
        %v525 = vsel %vm514, %v416, 0
        %v528 = vsel %vm514, %v418, 0
        %v531 = vsel %vm514, %v420, 0
        %v534 = vsel %vm514, %v422, 0
        %v537 = vsel %vm514, %v424, 0
        %v540 = vsel %vm514, %v426, 0
        %v543 = vsel %vm514, %v428, 0
        %v546 = vsel %vm514, %v430, 0
        %v549 = vsel %vm514, %v432, 0
        %v552 = vsel %vm514, %v434, 0
        %v555 = vsel %vm514, %v436, 0
        %v558 = vsel %vm514, %v438, 0
        %v561 = vsel %vm514, %v440, 0
        %vm563 = vcmask 1040384
        %vm564 = vcmask 1041408
        %v565 = vsel %vm563, 4294967295, 65535
        %v566 = vsel %vm564, %v565, 0
        %v568 = vand.u32 %v504, %v566
        %570 = vmatprep.subr.bf16.mxu0 0
        %571 = vmatpush1.bf16.msra.mxu0 %v502
        %572 = vmatprep.subr.bf16.mxu0 0
        %573 = vmatpush1.bf16.msra.mxu0 %v501
        %574 = vmatprep.subr.bf16.mxu0 0
        %575 = vmatpush1.bf16.msra.mxu0 %v500
        %576 = vmatprep.subr.bf16.mxu0 0
        %577 = vmatpush1.bf16.msra.mxu0 %v499
        %578 = vmatprep.subr.bf16.mxu0 0
        %579 = vmatpush1.bf16.msra.mxu0 %v498
        %580 = vmatprep.subr.bf16.mxu0 0
        %581 = vmatpush1.bf16.msra.mxu0 %v497
        %582 = vmatprep.subr.bf16.mxu0 0
        %583 = vmatpush1.bf16.msra.mxu0 %v496
        %584 = vmatprep.subr.bf16.mxu0 0
        %585 = vmatpush1.bf16.msra.mxu0 %v495
        %586 = vmatprep.subr.bf16.mxu0 0
        %587 = vmatpush2.bf16.msra.mxu0 0
        %588 = vmatprep.subr.bf16.mxu0 0
        %589 = vmatpush2.bf16.msra.mxu0 0
        %590 = vmatprep.subr.bf16.mxu0 0
        %591 = vmatpush2.bf16.msra.mxu0 0
        %592 = vmatprep.subr.bf16.mxu0 0
        %593 = vmatpush2.bf16.msra.mxu0 0
        %594 = vmatprep.subr.bf16.mxu0 0
        %595 = vmatpush2.bf16.msra.mxu0 0
        %596 = vmatprep.subr.bf16.mxu0 0
        %597 = vmatpush2.bf16.msra.mxu0 0
        %598 = vmatprep.subr.bf16.mxu0 0
        %599 = vmatpush2.bf16.msra.mxu0 %v568
        %600 = vmatprep.subr.bf16.mxu0 0
        %601 = vmatpush2.bf16.msra.mxu0 %v503
        %602 = vmatprep.mubr.bf16.mxu0 %v516
        %603 = vmatmul.mubr.bf16.gmra.mxu0 %v409
        %v604 = vpop.f32.mrf.mxu0
        %v605 = vadd.f32 0.0, %v604
        %v606 = vpop.f32.mrf.mxu0
        %v607 = vpop.f32.mrf.mxu0
        %v608 = vadd.f32 0.0, %v607
        %v609 = vpop.f32.mrf.mxu0
        %610 = vmatprep.mubr.bf16.mxu0 %v519
        %611 = vmatmul.mubr.bf16.gmra.mxu0 %v411
        %v612 = vpop.f32.mrf.mxu0
        %v613 = vadd.f32 0.0, %v612
        %v614 = vpop.f32.mrf.mxu0
        %v615 = vpop.f32.mrf.mxu0
        %v616 = vadd.f32 0.0, %v615
        %v617 = vpop.f32.mrf.mxu0
        %618 = vmatprep.mubr.bf16.mxu0 %v522
        %619 = vmatmul.mubr.bf16.gmra.mxu0 %v413
        %v620 = vpop.f32.mrf.mxu0
        %v621 = vadd.f32 0.0, %v620
        %v622 = vpop.f32.mrf.mxu0
        %v623 = vpop.f32.mrf.mxu0
        %v624 = vadd.f32 0.0, %v623
        %v625 = vpop.f32.mrf.mxu0
        %626 = vmatprep.mubr.bf16.mxu0 %v525
        %627 = vmatmul.mubr.bf16.gmra.mxu0 %v415
        %v628 = vpop.f32.mrf.mxu0
        %v629 = vadd.f32 0.0, %v628
        %v630 = vpop.f32.mrf.mxu0
        %v631 = vpop.f32.mrf.mxu0
        %v632 = vadd.f32 0.0, %v631
        %v633 = vpop.f32.mrf.mxu0
        %634 = vmatprep.mubr.bf16.mxu0 %v528
        %635 = vmatmul.mubr.bf16.gmra.mxu0 %v417
        %v636 = vpop.f32.mrf.mxu0
        %v637 = vadd.f32 0.0, %v636
        %v638 = vpop.f32.mrf.mxu0
        %v639 = vpop.f32.mrf.mxu0
        %v640 = vadd.f32 0.0, %v639
        %v641 = vpop.f32.mrf.mxu0
        %642 = vmatprep.mubr.bf16.mxu0 %v531
        %643 = vmatmul.mubr.bf16.gmra.mxu0 %v419
        %v644 = vpop.f32.mrf.mxu0
        %v645 = vadd.f32 0.0, %v644
        %v646 = vpop.f32.mrf.mxu0
        %v647 = vpop.f32.mrf.mxu0
        %v648 = vadd.f32 0.0, %v647
        %v649 = vpop.f32.mrf.mxu0
        %650 = vmatprep.mubr.bf16.mxu0 %v534
        %651 = vmatmul.mubr.bf16.gmra.mxu0 %v421
        %v652 = vpop.f32.mrf.mxu0
        %v653 = vadd.f32 0.0, %v652
        %v654 = vpop.f32.mrf.mxu0
        %v655 = vpop.f32.mrf.mxu0
        %v656 = vadd.f32 0.0, %v655
        %v657 = vpop.f32.mrf.mxu0
        %658 = vmatprep.mubr.bf16.mxu0 %v537
        %659 = vmatmul.mubr.bf16.gmra.mxu0 %v423
        %v660 = vpop.f32.mrf.mxu0
        %v661 = vadd.f32 0.0, %v660
        %v662 = vpop.f32.mrf.mxu0
        %v663 = vpop.f32.mrf.mxu0
        %v664 = vadd.f32 0.0, %v663
        %v665 = vpop.f32.mrf.mxu0
        %666 = vmatprep.mubr.bf16.mxu0 %v540
        %667 = vmatmul.mubr.bf16.gmra.mxu0 %v425
        %v668 = vpop.f32.mrf.mxu0
        %v669 = vadd.f32 0.0, %v668
        %v670 = vpop.f32.mrf.mxu0
        %v671 = vpop.f32.mrf.mxu0
        %v672 = vadd.f32 0.0, %v671
        %v673 = vpop.f32.mrf.mxu0
        %674 = vmatprep.mubr.bf16.mxu0 %v543
        %675 = vmatmul.mubr.bf16.gmra.mxu0 %v427
        %v676 = vpop.f32.mrf.mxu0
        %v677 = vadd.f32 0.0, %v676
        %v678 = vpop.f32.mrf.mxu0
        %v679 = vpop.f32.mrf.mxu0
        %v680 = vadd.f32 0.0, %v679
        %v681 = vpop.f32.mrf.mxu0
        %682 = vmatprep.mubr.bf16.mxu0 %v546
        %683 = vmatmul.mubr.bf16.gmra.mxu0 %v429
        %v684 = vpop.f32.mrf.mxu0
        %v685 = vadd.f32 0.0, %v684
        %v686 = vpop.f32.mrf.mxu0
        %v687 = vpop.f32.mrf.mxu0
        %v688 = vadd.f32 0.0, %v687
        %v689 = vpop.f32.mrf.mxu0
        %690 = vmatprep.mubr.bf16.mxu0 %v549
        %691 = vmatmul.mubr.bf16.gmra.mxu0 %v431
        %v692 = vpop.f32.mrf.mxu0
        %v693 = vadd.f32 0.0, %v692
        %v694 = vpop.f32.mrf.mxu0
        %v695 = vpop.f32.mrf.mxu0
        %v696 = vadd.f32 0.0, %v695
        %v697 = vpop.f32.mrf.mxu0
        %698 = vmatprep.mubr.bf16.mxu0 %v552
        %699 = vmatmul.mubr.bf16.gmra.mxu0 %v433
        %v700 = vpop.f32.mrf.mxu0
        %v701 = vadd.f32 0.0, %v700
        %v702 = vpop.f32.mrf.mxu0
        %v703 = vpop.f32.mrf.mxu0
        %v704 = vadd.f32 0.0, %v703
        %v705 = vpop.f32.mrf.mxu0
        %706 = vmatprep.mubr.bf16.mxu0 %v555
        %707 = vmatmul.mubr.bf16.gmra.mxu0 %v435
        %v708 = vpop.f32.mrf.mxu0
        %v709 = vadd.f32 0.0, %v708
        %v710 = vpop.f32.mrf.mxu0
        %v711 = vpop.f32.mrf.mxu0
        %v712 = vadd.f32 0.0, %v711
        %v713 = vpop.f32.mrf.mxu0
        %714 = vmatprep.mubr.bf16.mxu0 %v558
        %715 = vmatmul.mubr.bf16.gmra.mxu0 %v437
        %v716 = vpop.f32.mrf.mxu0
        %v717 = vadd.f32 0.0, %v716
        %v718 = vpop.f32.mrf.mxu0
        %v719 = vpop.f32.mrf.mxu0
        %v720 = vadd.f32 0.0, %v719
        %v721 = vpop.f32.mrf.mxu0
        %722 = vmatprep.mubr.bf16.mxu0 %v561
        %723 = vmatmul.mubr.bf16.gmra.mxu0 %v439
        %v724 = vpop.f32.mrf.mxu0
        %v725 = vadd.f32 0.0, %v724
        %v726 = vpop.f32.mrf.mxu0
        %v727 = vpop.f32.mrf.mxu0
        %v728 = vadd.f32 0.0, %v727
        %v729 = vpop.f32.mrf.mxu0
        %730 = vdwg.mxu0
        %v731 = vld [vmem:[%s256] sm:$0x1]
        %v733 = vlaneseq
        %v734 = vshrl.u32 %v733, 7
        %v735 = vsub.s32 0, %v734
        %v736 = vrot.slane %v731, %v735
        %v738 = vmul.f32 %v605, %v736
        %v739 = vmul.f32 %v608, %v736
        %v740 = vmul.f32 %v613, %v736
        %v741 = vmul.f32 %v616, %v736
        %v742 = vmul.f32 %v621, %v736
        %v743 = vmul.f32 %v624, %v736
        %v744 = vmul.f32 %v629, %v736
        %v745 = vmul.f32 %v632, %v736
        %v746 = vmul.f32 %v637, %v736
        %v747 = vmul.f32 %v640, %v736
        %v748 = vmul.f32 %v645, %v736
        %v749 = vmul.f32 %v648, %v736
        %v750 = vmul.f32 %v653, %v736
        %v751 = vmul.f32 %v656, %v736
        %v752 = vmul.f32 %v661, %v736
        %v753 = vmul.f32 %v664, %v736
        %v754 = vmul.f32 %v669, %v736
        %v755 = vmul.f32 %v672, %v736
        %v756 = vmul.f32 %v677, %v736
        %v757 = vmul.f32 %v680, %v736
        %v758 = vmul.f32 %v685, %v736
        %v759 = vmul.f32 %v688, %v736
        %v760 = vmul.f32 %v693, %v736
        %v761 = vmul.f32 %v696, %v736
        %v762 = vmul.f32 %v701, %v736
        %v763 = vmul.f32 %v704, %v736
        %v764 = vmul.f32 %v709, %v736
        %v765 = vmul.f32 %v712, %v736
        %v766 = vmul.f32 %v717, %v736
        %v767 = vmul.f32 %v720, %v736
        %v768 = vmul.f32 %v725, %v736
        %v769 = vmul.f32 %v728, %v736
        %v770 = vld [vmem:[%s259] sm:$0x1]
        %v772 = vlaneseq
        %v773 = vshrl.u32 %v772, 7
        %v774 = vsub.s32 0, %v773
        %v775 = vrot.slane %v770, %v774
        %v777 = vadd.f32 %v738, %v775
        %v778 = vadd.f32 %v739, %v775
        %v779 = vadd.f32 %v740, %v775
        %v780 = vadd.f32 %v741, %v775
        %v781 = vadd.f32 %v742, %v775
        %v782 = vadd.f32 %v743, %v775
        %v783 = vadd.f32 %v744, %v775
        %v784 = vadd.f32 %v745, %v775
        %v785 = vadd.f32 %v746, %v775
        %v786 = vadd.f32 %v747, %v775
        %v787 = vadd.f32 %v748, %v775
        %v788 = vadd.f32 %v749, %v775
        %v789 = vadd.f32 %v750, %v775
        %v790 = vadd.f32 %v751, %v775
        %v791 = vadd.f32 %v752, %v775
        %v792 = vadd.f32 %v753, %v775
        %v793 = vadd.f32 %v754, %v775
        %v794 = vadd.f32 %v755, %v775
        %v795 = vadd.f32 %v756, %v775
        %v796 = vadd.f32 %v757, %v775
        %v797 = vadd.f32 %v758, %v775
        %v798 = vadd.f32 %v759, %v775
        %v799 = vadd.f32 %v760, %v775
        %v800 = vadd.f32 %v761, %v775
        %v801 = vadd.f32 %v762, %v775
        %v802 = vadd.f32 %v763, %v775
        %v803 = vadd.f32 %v764, %v775
        %v804 = vadd.f32 %v765, %v775
        %v805 = vadd.f32 %v766, %v775
        %v806 = vadd.f32 %v767, %v775
        %v807 = vadd.f32 %v768, %v775
        %v808 = vadd.f32 %v769, %v775
        %v809 = vmax.f32 %v777, 0.0
        %v810 = vmax.f32 %v778, 0.0
        %v811 = vmax.f32 %v779, 0.0
        %v812 = vmax.f32 %v780, 0.0
        %v813 = vmax.f32 %v781, 0.0
        %v814 = vmax.f32 %v782, 0.0
        %v815 = vmax.f32 %v783, 0.0
        %v816 = vmax.f32 %v784, 0.0
        %v817 = vmax.f32 %v785, 0.0
        %v818 = vmax.f32 %v786, 0.0
        %v819 = vmax.f32 %v787, 0.0
        %v820 = vmax.f32 %v788, 0.0
        %v821 = vmax.f32 %v789, 0.0
        %v822 = vmax.f32 %v790, 0.0
        %v823 = vmax.f32 %v791, 0.0
        %v824 = vmax.f32 %v792, 0.0
        %v825 = vmax.f32 %v793, 0.0
        %v826 = vmax.f32 %v794, 0.0
        %v827 = vmax.f32 %v795, 0.0
        %v828 = vmax.f32 %v796, 0.0
        %v829 = vmax.f32 %v797, 0.0
        %v830 = vmax.f32 %v798, 0.0
        %v831 = vmax.f32 %v799, 0.0
        %v832 = vmax.f32 %v800, 0.0
        %v833 = vmax.f32 %v801, 0.0
        %v834 = vmax.f32 %v802, 0.0
        %v835 = vmax.f32 %v803, 0.0
        %v836 = vmax.f32 %v804, 0.0
        %v837 = vmax.f32 %v805, 0.0
        %v838 = vmax.f32 %v806, 0.0
        %v839 = vmax.f32 %v807, 0.0
        %v840 = vmax.f32 %v808, 0.0
        %v841 = vpack.c.bf16 %v810, %v809
        %v842 = vpack.c.bf16 %v812, %v811
        %v843 = vpack.c.bf16 %v814, %v813
        %v844 = vpack.c.bf16 %v816, %v815
        %v845 = vpack.c.bf16 %v818, %v817
        %v846 = vpack.c.bf16 %v820, %v819
        %v847 = vpack.c.bf16 %v822, %v821
        %v848 = vpack.c.bf16 %v824, %v823
        %v849 = vpack.c.bf16 %v826, %v825
        %v850 = vpack.c.bf16 %v828, %v827
        %v851 = vpack.c.bf16 %v830, %v829
        %v852 = vpack.c.bf16 %v832, %v831
        %v853 = vpack.c.bf16 %v834, %v833
        %v854 = vpack.c.bf16 %v836, %v835
        %v855 = vpack.c.bf16 %v838, %v837
        %v856 = vpack.c.bf16 %v840, %v839
        %v873 = vunpack.c.l.b16 %v841
        %v874 = vunpack.c.h.b16 %v841
        %v875 = vunpack.c.l.b16 %v842
        %v876 = vunpack.c.h.b16 %v842
        %v877 = vunpack.c.l.b16 %v843
        %v878 = vunpack.c.h.b16 %v843
        %v879 = vunpack.c.l.b16 %v844
        %v880 = vunpack.c.h.b16 %v844
        %v881 = vunpack.c.l.b16 %v845
        %v882 = vunpack.c.h.b16 %v845
        %v883 = vunpack.c.l.b16 %v846
        %v884 = vunpack.c.h.b16 %v846
        %v885 = vunpack.c.l.b16 %v847
        %v886 = vunpack.c.h.b16 %v847
        %v887 = vunpack.c.l.b16 %v848
        %v888 = vunpack.c.h.b16 %v848
        %v889 = vunpack.c.l.b16 %v849
        %v890 = vunpack.c.h.b16 %v849
        %v891 = vunpack.c.l.b16 %v850
        %v892 = vunpack.c.h.b16 %v850
        %v893 = vunpack.c.l.b16 %v851
        %v894 = vunpack.c.h.b16 %v851
        %v895 = vunpack.c.l.b16 %v852
        %v896 = vunpack.c.h.b16 %v852
        %v897 = vunpack.c.l.b16 %v853
        %v898 = vunpack.c.h.b16 %v853
        %v899 = vunpack.c.l.b16 %v854
        %v900 = vunpack.c.h.b16 %v854
        %v901 = vunpack.c.l.b16 %v855
        %v902 = vunpack.c.h.b16 %v855
        %v903 = vunpack.c.l.b16 %v856
        %v904 = vunpack.c.h.b16 %v856
        %v905 = vpack.c.b16 %v873, %v873
        %v906 = vpack.c.b16 %v874, %v874
        %v907 = vpack.c.b16 %v875, %v875
        %v908 = vpack.c.b16 %v876, %v876
        %v909 = vpack.c.b16 %v877, %v877
        %v910 = vpack.c.b16 %v878, %v878
        %v911 = vpack.c.b16 %v879, %v879
        %v912 = vpack.c.b16 %v880, %v880
        %v913 = vpack.c.b16 %v881, %v881
        %v914 = vpack.c.b16 %v882, %v882
        %v915 = vpack.c.b16 %v883, %v883
        %v916 = vpack.c.b16 %v884, %v884
        %v917 = vpack.c.b16 %v885, %v885
        %v918 = vpack.c.b16 %v886, %v886
        %v919 = vpack.c.b16 %v887, %v887
        %v920 = vpack.c.b16 %v888, %v888
        %v921 = vpack.c.b16 %v889, %v889
        %v922 = vpack.c.b16 %v890, %v890
        %v923 = vpack.c.b16 %v891, %v891
        %v924 = vpack.c.b16 %v892, %v892
        %v925 = vpack.c.b16 %v893, %v893
        %v926 = vpack.c.b16 %v894, %v894
        %v927 = vpack.c.b16 %v895, %v895
        %v928 = vpack.c.b16 %v896, %v896
        %v929 = vpack.c.b16 %v897, %v897
        %v930 = vpack.c.b16 %v898, %v898
        %v931 = vpack.c.b16 %v899, %v899
        %v932 = vpack.c.b16 %v900, %v900
        %v933 = vpack.c.b16 %v901, %v901
        %v934 = vpack.c.b16 %v902, %v902
        %v935 = vpack.c.b16 %v903, %v903
        %v936 = vpack.c.b16 %v904, %v904
        %969 = vst [vmem:[%s242] sm:$0xf] %v905
        %970 = vst [vmem:[%s242 + $0x4] sm:$0xf] %v906
        %971 = vst [vmem:[%s242 + $0x8] sm:$0xf] %v907
        %972 = vst [vmem:[%s242 + $0xc] sm:$0xf] %v908
        %973 = vst [vmem:[%s242 + $0x10] sm:$0xf] %v909
        %974 = vst [vmem:[%s242 + $0x14] sm:$0xf] %v910
        %975 = vst [vmem:[%s242 + $0x18] sm:$0xf] %v911
        %976 = vst [vmem:[%s242 + $0x1c] sm:$0xf] %v912
        %977 = vst [vmem:[%s242 + $0x20] sm:$0xf] %v913
        %978 = vst [vmem:[%s242 + $0x24] sm:$0xf] %v914
        %979 = vst [vmem:[%s242 + $0x28] sm:$0xf] %v915
        %980 = vst [vmem:[%s242 + $0x2c] sm:$0xf] %v916
        %981 = vst [vmem:[%s242 + $0x30] sm:$0xf] %v917
        %982 = vst [vmem:[%s242 + $0x34] sm:$0xf] %v918
        %983 = vst [vmem:[%s242 + $0x38] sm:$0xf] %v919
        %984 = vst [vmem:[%s242 + $0x3c] sm:$0xf] %v920
        %985 = vst [vmem:[%s242 + $0x40] sm:$0xf] %v921
        %986 = vst [vmem:[%s242 + $0x44] sm:$0xf] %v922
        %987 = vst [vmem:[%s242 + $0x48] sm:$0xf] %v923
        %988 = vst [vmem:[%s242 + $0x4c] sm:$0xf] %v924
        %989 = vst [vmem:[%s242 + $0x50] sm:$0xf] %v925
        %990 = vst [vmem:[%s242 + $0x54] sm:$0xf] %v926
        %991 = vst [vmem:[%s242 + $0x58] sm:$0xf] %v927
        %992 = vst [vmem:[%s242 + $0x5c] sm:$0xf] %v928
        %993 = vst [vmem:[%s242 + $0x60] sm:$0xf] %v929
        %994 = vst [vmem:[%s242 + $0x64] sm:$0xf] %v930
        %995 = vst [vmem:[%s242 + $0x68] sm:$0xf] %v931
        %996 = vst [vmem:[%s242 + $0x6c] sm:$0xf] %v932
        %997 = vst [vmem:[%s242 + $0x70] sm:$0xf] %v933
        %998 = vst [vmem:[%s242 + $0x74] sm:$0xf] %v934
        %999 = vst [vmem:[%s242 + $0x78] sm:$0xf] %v935
        %1000 = vst [vmem:[%s242 + $0x7c] sm:$0xf] %v936
        %s1001 = sand.u32 %s144, 1
        %s1002 = scalar_lea.sflag [#allocation3], %s1001
        %s1003 = sand.u32 %s144, 1
        %s1004 = smul.addr %s1003, 128
        %s1005 = scalar_lea.vmem [#allocation2], %s1004
        // Predicated region
        $region37: #{conv_bn.1} parent=35 // pred_check
          %p1006 = pneg %p154
        $region38: #{conv_bn.1} parent=35 // pred_check_branch
          %1008 = sbr.rel (%p1006) target = $region40
        $region39: #{conv_bn.1} parent=35 // pred_region
          %s1009 = smul.u32 32, %s22
          %s1011 = ssub.s32 2048, 2048
          %1012 = vsyncadd %s1002, %s1011
          %s1013 = sadd.s32 %s23, %s1009
          %s1014 = smul.addr %s1013, 64
          %s1015 = scalar_lea.hbm %s4, %s1014
          %s1016 = sshll.u32 %s1005, 4
          %s1017 = int_to_ptr.vmem [resolvable:$true] %s1016
          %1022 = dma.vmem_to_hbm [thread:$0]  %s1017, 2048, %s1015, %s1002, 64, 64, 4
        $region40: #{conv_bn.1} parent=35 // pred_fallthru
          _
      $region36: #{conv_bn.1} parent=5 // pred_fallthru
        _
      %p1023 = scmp.le.s32.totalorder 2, %s13
      // Predicated region
      $region41: #{conv_bn.1} parent=5 // pred_check
        %p1024 = pneg %p1023
      $region42: #{conv_bn.1} parent=5 // pred_check_branch
        %1026 = sbr.rel (%p1024) target = $region44
      $region43: #{conv_bn.1} parent=5 // pred_region
        %s1027 = ssub.s32 %s13, 2
        // Predicated region
        $region45: #{conv_bn.1} parent=43 // pred_check
          %p1028 = pneg %p160
        $region46: #{conv_bn.1} parent=43 // pred_check_branch
          %1030 = sbr.rel (%p1028) target = $region48
        $region47: #{conv_bn.1} parent=43 // pred_region
          %s1031 = sand.u32 %s145, 1
          %s1032 = scalar_lea.sflag [#allocation3], %s1031
          %s1033 = sand.u32 %s145, 1
          %s1034 = smul.addr %s1033, 128
          %s1035 = scalar_lea.vmem [#allocation2], %s1034
          %1036 = dma.done %s1032, 2048
        $region48: #{conv_bn.1} parent=43 // pred_fallthru
          _
      $region44: #{conv_bn.1} parent=5 // pred_fallthru
        _
    $region6: #{conv_bn.1} parent=1 // loop_footer
      %s17 = sadd.s32 1, %s13
    $region7: #{conv_bn.1} parent=1 // loop_footer_branch
      %12 = sbr.rel target = $region3
    $region8: #{conv_bn.1} parent=1 // loop_exit
      _
    %1037 = vsyncpa [#allocation3], 1
    %s1038 = scalar_lea.sflag [#allocation3], 1
    %1039 = vsyncpa %s1038, 1

</llo_original>
